<compile_context>
chip_gen: v6e
topology: v6e:2x2x1
jax: 0.10.0
libtpu: 0.0.40
codegen_flags: <defaults>
</compile_context>

<pallas_src>
import functools

import jax
import jax.numpy as jnp
from jax.experimental import pallas as pl
from jax.experimental.pallas import tpu as pltpu

NEG_SLOPE = 0.01   # nn.LeakyReLU default
BN_EPS = 1e-5      # nn.BatchNorm1d default


def _leaky_relu(x):
    return jnp.where(x > 0, x, NEG_SLOPE * x)


def _round_up(n, m):
    return ((n + m - 1) // m) * m


# ----------------------------- kernel ---------------------------------------


def encoder_kernel(x_ref, w1_ref, w2_ref, b_ref, out_ref):
    """Fused: (x @ W1' + b1') -> LeakyReLU -> (@ W2' + b2') -> LeakyReLU.

    BN is already folded into W*/b* on the host. b_ref is (2, H) float32:
    row 0 is the folded bias of layer 1, row 1 of layer 2. x/W may be bf16;
    both dots accumulate in f32 on the MXU.
    """
    x = x_ref[...]
    h1 = jnp.dot(x, w1_ref[...], preferred_element_type=jnp.float32) + b_ref[0:1, :]
    h1 = _leaky_relu(h1)
    h2 = jnp.dot(h1.astype(w2_ref.dtype), w2_ref[...],
                 preferred_element_type=jnp.float32) + b_ref[1:2, :]
    out_ref[...] = _leaky_relu(h2).astype(out_ref.dtype)


# --------------------------- pallas wrapper ----------------------------------


def _choose_tile(B, d_pad, H, x_bytes, w_bytes, max_tile, vmem_budget):
    """Pick the batch tile from a VMEM budget (conservative for v7x's 32 MiB)."""
    weight_bytes = d_pad * H * w_bytes + H * H * w_bytes + 8 * max(H, 128) * 4
    # Per-row cost: double-buffered x, double-buffered f32 out, f32 h1 intermediate.
    per_row = 2 * d_pad * x_bytes + 2 * H * 4 + H * 4
    avail = max(vmem_budget - weight_bytes - (1 << 20), per_row * 8)
    tb = min(max_tile, avail // per_row, _round_up(B, 8))
    tb = max(8, (tb // 8) * 8)
    # v7x megacore: make sure big batches split into >= 2 grid steps so both
    # TensorCores get work (measured near-zero cost on single-TC v5e/v6e).
    if B >= 1024 and pl.cdiv(B, tb) < 2:
        tb = max(8, _round_up(pl.cdiv(B, 2), 8))
    return tb


def encoder_apply(folded, x, *, max_tile=2048, vmem_budget_bytes=24 << 20):
    """Run the fused encoder. `folded` comes from fold_encoder_params()."""
    B, d_in = x.shape
    d_pad, H = folded["w1"].shape
    w_dtype = folded["w1"].dtype
    x_bytes = w_bytes = jnp.dtype(w_dtype).itemsize

    # Stream activations in the same (typically bf16) dtype as the folded weights
    # and lane-align the contraction dim (zero x cols match the zero W1 rows).
    if x.dtype != w_dtype:
        x = x.astype(w_dtype)
    if d_pad != d_in:
        x = jnp.pad(x, ((0, 0), (0, d_pad - d_in)))

    tb = _choose_tile(B, d_pad, H, x_bytes, w_bytes, max_tile, vmem_budget_bytes)
    grid = (pl.cdiv(B, tb),)        # ragged last block handled by Pallas masking

    # Explicit scoped-VMEM limit (v5e's default is only 16 MiB) with headroom,
    # capped well under v7x's 64 MiB physical VMEM.
    vmem_needed = (2 * tb * d_pad * x_bytes + 2 * tb * H * 4 + tb * H * 4
                   + d_pad * H * w_bytes + H * H * w_bytes + 8 * max(H, 128) * 4)
    vmem_limit = min(max(int(vmem_needed * 1.5) + (2 << 20), 16 << 20), 48 << 20)

    cost = pl.CostEstimate(
        flops=2 * B * (d_pad * H + H * H),
        transcendentals=0,
        bytes_accessed=(B * d_pad * x_bytes + d_pad * H * w_bytes
                        + H * H * w_bytes + 2 * H * 4 + B * H * 4))

    const = pl.Buffered(1)   # grid-invariant operands: no double-buffering
    out = pl.pallas_call(
        encoder_kernel,
        out_shape=jax.ShapeDtypeStruct((B, H), jnp.float32),
        grid_spec=pltpu.PrefetchScalarGridSpec(
            num_scalar_prefetch=0,
            grid=grid,
            in_specs=[
                pl.BlockSpec((tb, d_pad), lambda i: (i, 0)),      # x: tiled over batch
                pl.BlockSpec((d_pad, H), lambda i: (0, 0),        # W1' (BN folded)
                             pipeline_mode=const),
                pl.BlockSpec((H, H), lambda i: (0, 0),            # W2' (BN folded)
                             pipeline_mode=const),
                pl.BlockSpec((2, H), lambda i: (0, 0),            # packed biases
                             pipeline_mode=const),
            ],
            out_specs=pl.BlockSpec((tb, H), lambda i: (i, 0)),
        ),
        compiler_params=pltpu.CompilerParams(
            dimension_semantics=("parallel",),                    # megacore on v7x
            vmem_limit_bytes=vmem_limit),
        cost_estimate=cost,
    )(x, folded["w1"], folded["w2"], folded["b"])
    return out


# ------------------------- parameter construction ---------------------------


def _linear_init(key, fan_in, fan_out):
    """PyTorch-style nn.Linear init: U(-1/sqrt(fan_in), 1/sqrt(fan_in))."""
    kw, kb = jax.random.split(key)
    bound = 1.0 / jnp.sqrt(jnp.float32(fan_in))
    w = jax.random.uniform(kw, (fan_in, fan_out), jnp.float32, -bound, bound)
    b = jax.random.uniform(kb, (fan_out,), jnp.float32, -bound, bound)
    return w, b


def _default_bn(dim):
    """nn.BatchNorm1d default init / fresh running stats."""
    return dict(gamma=jnp.ones((dim,), jnp.float32),
                beta=jnp.zeros((dim,), jnp.float32),
                mean=jnp.zeros((dim,), jnp.float32),
                var=jnp.ones((dim,), jnp.float32))


def make_encoder_params(key, input_feature, latent_dim):
    k1, k2 = jax.random.split(key)
    w1, b1 = _linear_init(k1, input_feature, latent_dim)
    w2, b2 = _linear_init(k2, latent_dim, latent_dim)
    return dict(w1=w1, b1=b1, bn1=_default_bn(latent_dim),
                w2=w2, b2=b2, bn2=_default_bn(latent_dim))


def fold_encoder_params(p, *, dtype=jnp.bfloat16):
    """Fold BatchNorm into the Linear weights/biases; pad D_in to 128; cast."""
    def fold(w, b, bn):
        scale = bn["gamma"] / jnp.sqrt(bn["var"] + BN_EPS)      # (H,)
        shift = bn["beta"] - bn["mean"] * scale                 # (H,)
        return w * scale[None, :], b * scale + shift
    w1f, b1f = fold(p["w1"], p["b1"], p["bn1"])
    w2f, b2f = fold(p["w2"], p["b2"], p["bn2"])
    d_in = w1f.shape[0]
    d_pad = _round_up(d_in, 128)
    if d_pad != d_in:                                           # lane-align K once
        w1f = jnp.pad(w1f, ((0, d_pad - d_in), (0, 0)))
    return dict(w1=w1f.astype(dtype), w2=w2f.astype(dtype),
                b=jnp.stack([b1f, b2f], axis=0).astype(jnp.float32))  # (2, H)


# --------------------------- pure-JAX reference ------------------------------


def _ref_encoder(p, x):
    """Unfolded PyTorch-order reference (Linear -> BN -> LeakyReLU, twice)."""
    dot = functools.partial(jnp.dot, precision=jax.lax.Precision.HIGHEST)
    def bn(z, s):
        return (z - s["mean"]) / jnp.sqrt(s["var"] + BN_EPS) * s["gamma"] + s["beta"]
    h = _leaky_relu(bn(dot(x, p["w1"]) + p["b1"], p["bn1"]))
    return _leaky_relu(bn(dot(h, p["w2"]) + p["b2"], p["bn2"]))


# --------------------------------- main --------------------------------------


if __name__ == "__main__":
    INPUT_FEATURE = 384   # input feature dim (multiple of 128 here; padded otherwise)
    LATENT = 128          # latent dim

    key = jax.random.PRNGKey(0)
    kp, kx1, kx2 = jax.random.split(key, 3)
    params = make_encoder_params(kp, INPUT_FEATURE, LATENT)

    # Test 1: f32 path, ragged batch (13 rows, 8-row tiles -> 2 grid steps; the
    # last block is partially out of range: garbage rows read, OOB rows masked).
    x1 = jax.random.normal(kx1, (13, INPUT_FEATURE), jnp.float32)
    folded_f32 = fold_encoder_params(params, dtype=jnp.float32)
    out1 = encoder_apply(folded_f32, x1, max_tile=8)
    jax.block_until_ready(out1)
    ref1 = _ref_encoder(params, x1)
    assert out1.shape == (13, LATENT)
    err1 = float(jnp.max(jnp.abs(out1 - ref1)))
    assert err1 < 2e-3, f"f32 max abs err {err1}"

    # Test 2: default bf16-streamed weights/activations (f32 MXU accumulation).
    x2 = jax.random.normal(kx2, (16, INPUT_FEATURE), jnp.float32)
    folded_bf16 = fold_encoder_params(params)          # bf16 by default
    out2 = encoder_apply(folded_bf16, x2)
    jax.block_until_ready(out2)
    ref2 = _ref_encoder(params, x2)
    assert out2.shape == (16, LATENT)
    err2 = float(jnp.max(jnp.abs(out2 - ref2)))
    assert err2 < 3e-2, f"bf16 max abs err {err2}"     # bf16 streaming tolerance

    print("KERNEL_OK")
</pallas_src>

<mosaic_0001>
module attributes {stable_mosaic.version = 11 : i64} {
  func.func @encoder_kernel(%arg0: i32, %arg1: memref<8x384xf32, #tpu.memory_space<vmem>>, %arg2: memref<384x128xf32, #tpu.memory_space<vmem>>, %arg3: memref<128x128xf32, #tpu.memory_space<vmem>>, %arg4: memref<2x128xf32, #tpu.memory_space<vmem>>, %arg5: memref<8x128xf32, #tpu.memory_space<vmem>>) attributes {dimension_semantics = [#tpu.dimension_semantics<parallel>], iteration_bounds = array<i64: 2>, scalar_prefetch = 0 : i64, scratch_operands = 0 : i64, tpu.core_type = #tpu.core_type<tc>, window_params = [{transform_indices = @transform_0, window_bounds = array<i64: 8, 384>}, {pipeline_mode = #tpu.pipeline_mode<synchronous>, transform_indices = @transform_1, window_bounds = array<i64: 384, 128>}, {pipeline_mode = #tpu.pipeline_mode<synchronous>, transform_indices = @transform_2, window_bounds = array<i64: 128, 128>}, {pipeline_mode = #tpu.pipeline_mode<synchronous>, transform_indices = @transform_3, window_bounds = array<i64: 2, 128>}, {transform_indices = @transform_4, window_bounds = array<i64: 8, 128>}]} {
    %c0 = arith.constant 0 : index
    %c0_0 = arith.constant 0 : index
    %0 = vector.load %arg1[%c0, %c0_0] : memref<8x384xf32, #tpu.memory_space<vmem>>, vector<8x384xf32>
    %c0_1 = arith.constant 0 : index
    %c0_2 = arith.constant 0 : index
    %1 = vector.load %arg2[%c0_1, %c0_2] : memref<384x128xf32, #tpu.memory_space<vmem>>, vector<384x128xf32>
    %cst = arith.constant dense<0.000000e+00> : vector<8x128xf32>
    %2 = tpu.matmul %0, %1, %cst {dimension_numbers = #tpu.dot_dimension_numbers<[1], [0], [0], [1], [0, 0, 1, 1], [], []>} : vector<8x384xf32>, vector<384x128xf32>, vector<8x128xf32> -> vector<8x128xf32>
    %c0_3 = arith.constant 0 : index
    %c0_4 = arith.constant 0 : index
    %3 = vector.load %arg4[%c0_3, %c0_4] : memref<2x128xf32, #tpu.memory_space<vmem>>, vector<1x128xf32>
    %4 = vector.broadcast %3 : vector<1x128xf32> to vector<8x128xf32>
    %5 = arith.addf %2, %4 : vector<8x128xf32>
    %cst_5 = arith.constant 0.000000e+00 : f32
    %6 = vector.broadcast %cst_5 : f32 to vector<8x128xf32>
    %7 = arith.cmpf ogt, %5, %6 : vector<8x128xf32>
    %cst_6 = arith.constant 0.00999999977 : f32
    %8 = vector.broadcast %cst_6 : f32 to vector<8x128xf32>
    %9 = arith.mulf %8, %5 : vector<8x128xf32>
    %10 = arith.select %7, %5, %9 : vector<8x128xi1>, vector<8x128xf32>
    %c0_7 = arith.constant 0 : index
    %c0_8 = arith.constant 0 : index
    %11 = vector.load %arg3[%c0_7, %c0_8] : memref<128x128xf32, #tpu.memory_space<vmem>>, vector<128x128xf32>
    %cst_9 = arith.constant dense<0.000000e+00> : vector<8x128xf32>
    %12 = tpu.matmul %10, %11, %cst_9 {dimension_numbers = #tpu.dot_dimension_numbers<[1], [0], [0], [1], [0, 0, 1, 1], [], []>} : vector<8x128xf32>, vector<128x128xf32>, vector<8x128xf32> -> vector<8x128xf32>
    %c1 = arith.constant 1 : index
    %c0_10 = arith.constant 0 : index
    %13 = vector.load %arg4[%c1, %c0_10] : memref<2x128xf32, #tpu.memory_space<vmem>>, vector<1x128xf32>
    %14 = vector.broadcast %13 : vector<1x128xf32> to vector<8x128xf32>
    %15 = arith.addf %12, %14 : vector<8x128xf32>
    %cst_11 = arith.constant 0.000000e+00 : f32
    %16 = vector.broadcast %cst_11 : f32 to vector<8x128xf32>
    %17 = arith.cmpf ogt, %15, %16 : vector<8x128xf32>
    %cst_12 = arith.constant 0.00999999977 : f32
    %18 = vector.broadcast %cst_12 : f32 to vector<8x128xf32>
    %19 = arith.mulf %18, %15 : vector<8x128xf32>
    %20 = arith.select %17, %15, %19 : vector<8x128xi1>, vector<8x128xf32>
    %c0_13 = arith.constant 0 : index
    %c0_14 = arith.constant 0 : index
    %21 = vector.load %arg5[%c0_13, %c0_14] : memref<8x128xf32, #tpu.memory_space<vmem>>, vector<8x128xf32>
    tpu.vector_store %arg5[%c0_13, %c0_14], %20 {strides = array<i32>} : memref<8x128xf32, #tpu.memory_space<vmem>>, vector<8x128xf32>,
    return
  }
  func.func @transform_0(%arg0: i32) -> (i32, i32) {
    %c0_i32 = arith.constant 0 : i32
    %c0_i32_0 = arith.constant 0 : i32
    return %arg0, %c0_i32 : i32, i32
  }
  func.func @transform_1(%arg0: i32) -> (i32, i32) {
    %c0_i32 = arith.constant 0 : i32
    %c0_i32_0 = arith.constant 0 : i32
    %c0_i32_1 = arith.constant 0 : i32
    return %c0_i32, %c0_i32_0 : i32, i32
  }
  func.func @transform_2(%arg0: i32) -> (i32, i32) {
    %c0_i32 = arith.constant 0 : i32
    %c0_i32_0 = arith.constant 0 : i32
    %c0_i32_1 = arith.constant 0 : i32
    return %c0_i32, %c0_i32_0 : i32, i32
  }
  func.func @transform_3(%arg0: i32) -> (i32, i32) {
    %c0_i32 = arith.constant 0 : i32
    %c0_i32_0 = arith.constant 0 : i32
    %c0_i32_1 = arith.constant 0 : i32
    return %c0_i32, %c0_i32_0 : i32, i32
  }
  func.func @transform_4(%arg0: i32) -> (i32, i32) {
    %c0_i32 = arith.constant 0 : i32
    %c0_i32_0 = arith.constant 0 : i32
    return %arg0, %c0_i32 : i32, i32
  }
}

</mosaic_0001>

<llo_original>
// kernel: tpu_custom_call.1
$region0: #{tpu_custom_call.1}
  #allocation0 [shape = 'u32[]', space=smem, size = 0x4, offset = 0x4, fixed_abs, tag = 'smem constant byte address 0x4 - core index']
  #allocation1 [shape = 'u32[144,128]{1,0:T(1,128)}', space=vmem, size = 0x12000, scoped, tag = 'internal scratch']
  %s0 = inlined_call_operand.hbm [shape: f32[13,384], index: 0, kind: input, shape index: {}]
  %s1 = inlined_call_operand.hbm [shape: f32[384,128], index: 1, kind: input, shape index: {}]
  %s2 = inlined_call_operand.hbm [shape: f32[128,128], index: 2, kind: input, shape index: {}]
  %s3 = inlined_call_operand.vmem [shape: f32[2,128], index: 3, kind: input, shape index: {}]
  %s4 = inlined_call_operand.hbm [shape: f32[13,128], index: 4, kind: output, shape index: {}]
  %s5 = sld [smem:[#allocation0]]
  $region61: #{tpu_custom_call.1} parent=0
    _
  %s7 = ssub.s32 1, %s5
  %s8 = scalar_select 0, %s7, %s5
  $region1: #{tpu_custom_call.1} parent=0
    #allocation2 [shape = 'u8[24576]{0}', space=vmem, size = 0x6000, scoped, tag = 'input window, operand 0']
    #allocation3 [shape = 's32[2]{0}', space=sflag, size = 0x8, scoped, tag = 'scoped memory for tpu_custom_call.1']
    #allocation4 [shape = 's32[2]{0}', space=sflag, size = 0x8, scoped, tag = 'scoped memory for tpu_custom_call.1']
    #allocation5 [shape = 'u8[196608]{0}', space=vmem, size = 0x30000, scoped, tag = 'input window, operand 1, single buffered']
    #allocation6 [shape = 's32[1]{0}', space=sflag, size = 0x4, scoped, tag = 'scoped memory for tpu_custom_call.1']
    #allocation7 [shape = 'u8[65536]{0}', space=vmem, size = 0x10000, scoped, tag = 'input window, operand 2, single buffered']
    #allocation8 [shape = 'u8[8192]{0}', space=vmem, size = 0x2000, scoped, tag = 'output window, operand 0']
    %9 = vsyncpa [#allocation3], 0
    %s10 = scalar_lea.sflag [#allocation3], 1
    %11 = vsyncpa %s10, 0
    %12 = vsyncpa [#allocation6], 0
    %13 = vsyncpa [#allocation4], 0
    %s14 = scalar_lea.sflag [#allocation4], 1
    %15 = vsyncpa %s14, 0
    loop: start=0, step=1, limit=4
    $region2: #{tpu_custom_call.1} parent=1 // loop_pre_header
      _
    $region3: #{tpu_custom_call.1} parent=1 // loop_header
      %s17 = sphi 0, %s21
      %p18 = scmp.ge.s32.totalorder %s17, 4
      %s27 = sphi 0, %s29
      %s30 = sphi 0, %s27
      %s31 = sphi 0, %s30
      %s47 = sphi 0, %s31
      %s51 = sphi 0, %s51
      %s53 = sphi 0, %s51
      %s54 = sphi 0, %s53
      %s68 = sphi 0, %s54
      %s72 = sphi 0, %s72
      %s74 = sphi 0, %s72
      %s75 = sphi 0, %s74
      %s89 = sphi 0, %s75
      %s93 = sphi 0, %s93
      %s95 = sphi 0, %s93
      %s96 = sphi 0, %s95
      %s110 = sphi 0, %s96
      %s116 = sphi 0, %s118
      %s119 = sphi 0, %s116
      %s120 = sphi 0, %s119
      %s136 = sphi 0, %s120
    $region4: #{tpu_custom_call.1} parent=1 // loop_header_branch
      %20 = sbr.rel (%p18) target = $region8
    $region5: #{tpu_custom_call.1} parent=1 // loop_body
      %s22 = ssub.s32 %s17, 1
      %s23 = ssub.s32 %s17, 2
      %s24 = sadd.s32 %s17, 1
      %s25 = ssub.s32 %s17, %s24
      %p26 = scmp.eq.s32.totalorder %s25, 0
      %s28 = sadd.s32 %s27, 1
      %s29 = scalar_select %p26, %s27, %s28
      %p32 = pneg %p26
      %p33 = scmp.eq.s32.totalorder %s17, 1
      %p34 = por %p32, %p33
      %p35 = scmp.ne.s32.totalorder %s27, %s30
      %p36 = scmp.eq.s32.totalorder %s17, 0
      %p37 = por %p35, %p36
      %p38 = scmp.ne.s32.totalorder %s27, %s30
      %p39 = scmp.eq.s32.totalorder %s22, 1
      %p40 = por %p38, %p39
      %p41 = scmp.ne.s32.totalorder %s30, %s31
      %p42 = scmp.eq.s32.totalorder %s22, 0
      %p43 = por %p41, %p42
      %p44 = scmp.ne.s32.totalorder %s30, %s31
      %p45 = scmp.eq.s32.totalorder %s23, 1
      %p46 = por %p44, %p45
      %p48 = scmp.ne.s32.totalorder %s31, %s47
      %p49 = scmp.eq.s32.totalorder %s23, 0
      %p50 = por %p48, %p49
      %s52 = sadd.s32 %s51, 1
      %p55 = scmp.eq.s32.totalorder %s17, 1
      %p56 = scmp.ne.s32.totalorder %s51, %s53
      %p57 = scmp.eq.s32.totalorder %s17, 0
      %p58 = por %p56, %p57
      %p59 = scmp.ne.s32.totalorder %s51, %s53
      %p60 = scmp.eq.s32.totalorder %s22, 1
      %p61 = por %p59, %p60
      %p62 = scmp.ne.s32.totalorder %s53, %s54
      %p63 = scmp.eq.s32.totalorder %s22, 0
      %p64 = por %p62, %p63
      %p65 = scmp.ne.s32.totalorder %s53, %s54
      %p66 = scmp.eq.s32.totalorder %s23, 1
      %p67 = por %p65, %p66
      %p69 = scmp.ne.s32.totalorder %s54, %s68
      %p70 = scmp.eq.s32.totalorder %s23, 0
      %p71 = por %p69, %p70
      %s73 = sadd.s32 %s72, 1
      %p76 = scmp.eq.s32.totalorder %s17, 1
      %p77 = scmp.ne.s32.totalorder %s72, %s74
      %p78 = scmp.eq.s32.totalorder %s17, 0
      %p79 = por %p77, %p78
      %p80 = scmp.ne.s32.totalorder %s72, %s74
      %p81 = scmp.eq.s32.totalorder %s22, 1
      %p82 = por %p80, %p81
      %p83 = scmp.ne.s32.totalorder %s74, %s75
      %p84 = scmp.eq.s32.totalorder %s22, 0
      %p85 = por %p83, %p84
      %p86 = scmp.ne.s32.totalorder %s74, %s75
      %p87 = scmp.eq.s32.totalorder %s23, 1
      %p88 = por %p86, %p87
      %p90 = scmp.ne.s32.totalorder %s75, %s89
      %p91 = scmp.eq.s32.totalorder %s23, 0
      %p92 = por %p90, %p91
      %s94 = sadd.s32 %s93, 1
      %p97 = scmp.eq.s32.totalorder %s17, 1
      %p98 = scmp.ne.s32.totalorder %s93, %s95
      %p99 = scmp.eq.s32.totalorder %s17, 0
      %p100 = por %p98, %p99
      %p101 = scmp.ne.s32.totalorder %s93, %s95
      %p102 = scmp.eq.s32.totalorder %s22, 1
      %p103 = por %p101, %p102
      %p104 = scmp.ne.s32.totalorder %s95, %s96
      %p105 = scmp.eq.s32.totalorder %s22, 0
      %p106 = por %p104, %p105
      %p107 = scmp.ne.s32.totalorder %s95, %s96
      %p108 = scmp.eq.s32.totalorder %s23, 1
      %p109 = por %p107, %p108
      %p111 = scmp.ne.s32.totalorder %s96, %s110
      %p112 = scmp.eq.s32.totalorder %s23, 0
      %p113 = por %p111, %p112
      %s114 = ssub.s32 %s17, %s24
      %p115 = scmp.eq.s32.totalorder %s114, 0
      %s117 = sadd.s32 %s116, 1
      %s118 = scalar_select %p115, %s116, %s117
      %p121 = pneg %p115
      %p122 = scmp.eq.s32.totalorder %s17, 1
      %p123 = por %p121, %p122
      %p124 = scmp.ne.s32.totalorder %s116, %s119
      %p125 = scmp.eq.s32.totalorder %s17, 0
      %p126 = por %p124, %p125
      %p127 = scmp.ne.s32.totalorder %s116, %s119
      %p128 = scmp.eq.s32.totalorder %s22, 1
      %p129 = por %p127, %p128
      %p130 = scmp.ne.s32.totalorder %s119, %s120
      %p131 = scmp.eq.s32.totalorder %s22, 0
      %p132 = por %p130, %p131
      %p133 = scmp.ne.s32.totalorder %s119, %s120
      %p134 = scmp.eq.s32.totalorder %s23, 1
      %p135 = por %p133, %p134
      %p137 = scmp.ne.s32.totalorder %s120, %s136
      %p138 = scmp.eq.s32.totalorder %s23, 0
      %p139 = por %p137, %p138
      %p140 = scmp.le.s32.totalorder 1, %s17
      %p141 = scmp.lt.s32.totalorder %s17, 3
      %p142 = pnand %p140, %p141
      %p143 = pneg %p142
      // Predicated region
      $region9: #{tpu_custom_call.1} parent=5 // pred_check
        _
      $region10: #{tpu_custom_call.1} parent=5 // pred_check_branch
        %145 = sbr.rel (%p142) target = $region12
      $region11: #{tpu_custom_call.1} parent=5 // pred_region
        %s146 = ssub.s32 %s17, 1
        // Predicated region
        $region13: #{tpu_custom_call.1} parent=11 // pred_check
          %p147 = pneg %p64
        $region14: #{tpu_custom_call.1} parent=11 // pred_check_branch
          %149 = sbr.rel (%p147) target = $region16
        $region15: #{tpu_custom_call.1} parent=11 // pred_region
          %s151 = ssub.s32 6144, 6144
          %152 = vsyncadd [#allocation6], %s151
          %s153 = sshll.u32 [#allocation5], 4
          %s154 = int_to_ptr.vmem [resolvable:$true] %s153
          %159 = dma.hbm_to_vmem [thread:$0]  %s1, 6144, %s154, [#allocation6], 128, 128, 8
        $region16: #{tpu_custom_call.1} parent=11 // pred_fallthru
          _
        // Predicated region
        $region17: #{tpu_custom_call.1} parent=11 // pred_check
          %p160 = pneg %p85
        $region18: #{tpu_custom_call.1} parent=11 // pred_check_branch
          %162 = sbr.rel (%p160) target = $region20
        $region19: #{tpu_custom_call.1} parent=11 // pred_region
          %s164 = ssub.s32 2048, 2048
          %165 = vsyncadd [#allocation6], %s164
          %s166 = sshll.u32 [#allocation7], 4
          %s167 = int_to_ptr.vmem [resolvable:$true] %s166
          %172 = dma.hbm_to_vmem [thread:$0]  %s2, 2048, %s167, [#allocation6], 128, 128, 8
        $region20: #{tpu_custom_call.1} parent=11 // pred_fallthru
          _
        // Predicated region
        $region21: #{tpu_custom_call.1} parent=11 // pred_check
          %p173 = pneg %p106
        $region22: #{tpu_custom_call.1} parent=11 // pred_check_branch
          %175 = sbr.rel (%p173) target = $region24
        $region23: #{tpu_custom_call.1} parent=11 // pred_region
          _
        $region24: #{tpu_custom_call.1} parent=11 // pred_fallthru
          _
      $region12: #{tpu_custom_call.1} parent=5 // pred_fallthru
        _
      %p176 = scmp.lt.s32.totalorder %s17, 2
      // Predicated region
      $region25: #{tpu_custom_call.1} parent=5 // pred_check
        %p177 = pneg %p176
      $region26: #{tpu_custom_call.1} parent=5 // pred_check_branch
        %179 = sbr.rel (%p177) target = $region28
      $region27: #{tpu_custom_call.1} parent=5 // pred_region
        // Predicated region
        $region29: #{tpu_custom_call.1} parent=27 // pred_check
          %p180 = pneg %p37
        $region30: #{tpu_custom_call.1} parent=27 // pred_check_branch
          %182 = sbr.rel (%p180) target = $region32
        $region31: #{tpu_custom_call.1} parent=27 // pred_region
          %s183 = sand.u32 %s27, 1
          %s184 = scalar_lea.sflag [#allocation3], %s183
          %s185 = sand.u32 %s27, 1
          %s186 = smul.addr %s185, 24
          %s187 = scalar_lea.vmem [#allocation2], %s186
          %s189 = ssub.s32 384, 384
          %190 = vsyncadd %s184, %s189
          %s191 = smul.addr %s17, 3
          %s192 = smul.addr %s191, 128
          %s193 = scalar_lea.hbm %s0, %s192
          %s195 = sshll.u32 %s187, 4
          %s196 = int_to_ptr.vmem [resolvable:$true] %s195
          %198 = dma.hbm_to_vmem [thread:$0]  %s193, 384, %s196, %s184
        $region32: #{tpu_custom_call.1} parent=27 // pred_fallthru
          _
      $region28: #{tpu_custom_call.1} parent=5 // pred_fallthru
        _
      %p199 = scmp.le.s32.totalorder 1, %s17
      %p200 = scmp.lt.s32.totalorder %s17, 3
      %p201 = pnand %p199, %p200
      %p202 = pneg %p201
      // Predicated region
      $region33: #{tpu_custom_call.1} parent=5 // pred_check
        _
      $region34: #{tpu_custom_call.1} parent=5 // pred_check_branch
        %204 = sbr.rel (%p201) target = $region36
      $region35: #{tpu_custom_call.1} parent=5 // pred_region
        %s205 = ssub.s32 %s17, 1
        %s206 = sand.u32 %s30, 1
        %s207 = scalar_lea.sflag [#allocation3], %s206
        %s208 = sand.u32 %s30, 1
        %s209 = smul.addr %s208, 24
        %s210 = scalar_lea.vmem [#allocation2], %s209
        // Predicated region
        $region37: #{tpu_custom_call.1} parent=35 // pred_check
          %p211 = pneg %p43
        $region38: #{tpu_custom_call.1} parent=35 // pred_check_branch
          %213 = sbr.rel (%p211) target = $region40
        $region39: #{tpu_custom_call.1} parent=35 // pred_region
          %214 = dma.done %s207, 384
        $region40: #{tpu_custom_call.1} parent=35 // pred_fallthru
          _
        // Predicated region
        $region41: #{tpu_custom_call.1} parent=35 // pred_check
          %p215 = pneg %p64
        $region42: #{tpu_custom_call.1} parent=35 // pred_check_branch
          %217 = sbr.rel (%p215) target = $region44
        $region43: #{tpu_custom_call.1} parent=35 // pred_region
          %218 = dma.done [#allocation6], 6144
        $region44: #{tpu_custom_call.1} parent=35 // pred_fallthru
          _
        // Predicated region
        $region45: #{tpu_custom_call.1} parent=35 // pred_check
          %p219 = pneg %p85
        $region46: #{tpu_custom_call.1} parent=35 // pred_check_branch
          %221 = sbr.rel (%p219) target = $region48
        $region47: #{tpu_custom_call.1} parent=35 // pred_region
          %222 = dma.done [#allocation6], 2048
        $region48: #{tpu_custom_call.1} parent=35 // pred_fallthru
          _
        %s223 = sand.u32 %s30, 1
        %s224 = scalar_lea.sflag [#allocation3], %s223
        %s225 = sand.u32 %s30, 1
        %s226 = smul.addr %s225, 24
        %s227 = scalar_lea.vmem [#allocation2], %s226
        %p228 = pneg %p43
        %p229 = pneg %p40
        %p230 = pneg %p64
        %p231 = pneg %p61
        %p232 = pneg %p85
        %p233 = pneg %p82
        %p234 = pneg %p106
        %p235 = pneg %p103
        %p236 = pneg %p132
        %p237 = pneg %p129
        %s238 = sand.u32 %s119, 1
        %s239 = scalar_lea.sflag [#allocation4], %s238
        %s240 = sand.u32 %s119, 1
        %s241 = smul.addr %s240, 8
        %s242 = scalar_lea.vmem [#allocation8], %s241
        %v243 = vld [vmem:[%s210] sm:$0xff]
        %v244 = vld [vmem:[%s210 + $0x8] sm:$0xff]
        %v245 = vld [vmem:[%s210 + $0x10] sm:$0xff]
        %v246 = vld [vmem:[#allocation5] sm:$0xff]
        %v247 = vld [vmem:[#allocation5 + $0x8] sm:$0xff]
        %v248 = vld [vmem:[#allocation5 + $0x10] sm:$0xff]
        %v249 = vld [vmem:[#allocation5 + $0x18] sm:$0xff]
        %v250 = vld [vmem:[#allocation5 + $0x20] sm:$0xff]
        %v251 = vld [vmem:[#allocation5 + $0x28] sm:$0xff]
        %v252 = vld [vmem:[#allocation5 + $0x30] sm:$0xff]
        %v253 = vld [vmem:[#allocation5 + $0x38] sm:$0xff]
        %v254 = vld [vmem:[#allocation5 + $0x40] sm:$0xff]
        %v255 = vld [vmem:[#allocation5 + $0x48] sm:$0xff]
        %v256 = vld [vmem:[#allocation5 + $0x50] sm:$0xff]
        %v257 = vld [vmem:[#allocation5 + $0x58] sm:$0xff]
        %v258 = vld [vmem:[#allocation5 + $0x60] sm:$0xff]
        %v259 = vld [vmem:[#allocation5 + $0x68] sm:$0xff]
        %v260 = vld [vmem:[#allocation5 + $0x70] sm:$0xff]
        %v261 = vld [vmem:[#allocation5 + $0x78] sm:$0xff]
        %v262 = vld [vmem:[#allocation5 + $0x80] sm:$0xff]
        %v263 = vld [vmem:[#allocation5 + $0x88] sm:$0xff]
        %v264 = vld [vmem:[#allocation5 + $0x90] sm:$0xff]
        %v265 = vld [vmem:[#allocation5 + $0x98] sm:$0xff]
        %v266 = vld [vmem:[#allocation5 + $0xa0] sm:$0xff]
        %v267 = vld [vmem:[#allocation5 + $0xa8] sm:$0xff]
        %v268 = vld [vmem:[#allocation5 + $0xb0] sm:$0xff]
        %v269 = vld [vmem:[#allocation5 + $0xb8] sm:$0xff]
        %v270 = vld [vmem:[#allocation5 + $0xc0] sm:$0xff]
        %v271 = vld [vmem:[#allocation5 + $0xc8] sm:$0xff]
        %v272 = vld [vmem:[#allocation5 + $0xd0] sm:$0xff]
        %v273 = vld [vmem:[#allocation5 + $0xd8] sm:$0xff]
        %v274 = vld [vmem:[#allocation5 + $0xe0] sm:$0xff]
        %v275 = vld [vmem:[#allocation5 + $0xe8] sm:$0xff]
        %v276 = vld [vmem:[#allocation5 + $0xf0] sm:$0xff]
        %v277 = vld [vmem:[#allocation5 + $0xf8] sm:$0xff]
        %v278 = vld [vmem:[#allocation5 + $0x100] sm:$0xff]
        %v279 = vld [vmem:[#allocation5 + $0x108] sm:$0xff]
        %v280 = vld [vmem:[#allocation5 + $0x110] sm:$0xff]
        %v281 = vld [vmem:[#allocation5 + $0x118] sm:$0xff]
        %v282 = vld [vmem:[#allocation5 + $0x120] sm:$0xff]
        %v283 = vld [vmem:[#allocation5 + $0x128] sm:$0xff]
        %v284 = vld [vmem:[#allocation5 + $0x130] sm:$0xff]
        %v285 = vld [vmem:[#allocation5 + $0x138] sm:$0xff]
        %v286 = vld [vmem:[#allocation5 + $0x140] sm:$0xff]
        %v287 = vld [vmem:[#allocation5 + $0x148] sm:$0xff]
        %v288 = vld [vmem:[#allocation5 + $0x150] sm:$0xff]
        %v289 = vld [vmem:[#allocation5 + $0x158] sm:$0xff]
        %v290 = vld [vmem:[#allocation5 + $0x160] sm:$0xff]
        %v291 = vld [vmem:[#allocation5 + $0x168] sm:$0xff]
        %v292 = vld [vmem:[#allocation5 + $0x170] sm:$0xff]
        %v293 = vld [vmem:[#allocation5 + $0x178] sm:$0xff]
        %v294 = vld [vmem:[%s3] sm:$0x1]
        %v295 = vlaneseq
        %v296 = vshrl.u32 %v295, 7
        %v297 = vsub.s32 0, %v296
        %v298 = vrot.slane %v294, %v297
        %299 = vmatprep.subr.mxu0 0.0
        %300 = vmatpush1.msra.mxu0 %v261
        %301 = vmatprep.subr.mxu0 0.0
        %302 = vmatpush1.msra.mxu0 %v260
        %303 = vmatprep.subr.mxu0 0.0
        %304 = vmatpush1.msra.mxu0 %v259
        %305 = vmatprep.subr.mxu0 0.0
        %306 = vmatpush1.msra.mxu0 %v258
        %307 = vmatprep.subr.mxu0 0.0
        %308 = vmatpush1.msra.mxu0 %v257
        %309 = vmatprep.subr.mxu0 0.0
        %310 = vmatpush1.msra.mxu0 %v256
        %311 = vmatprep.subr.mxu0 0.0
        %312 = vmatpush1.msra.mxu0 %v255
        %313 = vmatprep.subr.mxu0 0.0
        %314 = vmatpush1.msra.mxu0 %v254
        %315 = vmatprep.subr.mxu0 0.0
        %316 = vmatpush1.msra.mxu0 %v253
        %317 = vmatprep.subr.mxu0 0.0
        %318 = vmatpush1.msra.mxu0 %v252
        %319 = vmatprep.subr.mxu0 0.0
        %320 = vmatpush1.msra.mxu0 %v251
        %321 = vmatprep.subr.mxu0 0.0
        %322 = vmatpush1.msra.mxu0 %v250
        %323 = vmatprep.subr.mxu0 0.0
        %324 = vmatpush1.msra.mxu0 %v249
        %325 = vmatprep.subr.mxu0 0.0
        %326 = vmatpush1.msra.mxu0 %v248
        %327 = vmatprep.subr.mxu0 0.0
        %328 = vmatpush1.msra.mxu0 %v247
        %329 = vmatprep.subr.mxu0 0.0
        %330 = vmatpush1.msra.mxu0 %v246
        %331 = vmatprep.subr.mxu0 0.0
        %332 = vmatpush2.msra.mxu0 %v277
        %333 = vmatprep.subr.mxu0 0.0
        %334 = vmatpush2.msra.mxu0 %v276
        %335 = vmatprep.subr.mxu0 0.0
        %336 = vmatpush2.msra.mxu0 %v275
        %337 = vmatprep.subr.mxu0 0.0
        %338 = vmatpush2.msra.mxu0 %v274
        %339 = vmatprep.subr.mxu0 0.0
        %340 = vmatpush2.msra.mxu0 %v273
        %341 = vmatprep.subr.mxu0 0.0
        %342 = vmatpush2.msra.mxu0 %v272
        %343 = vmatprep.subr.mxu0 0.0
        %344 = vmatpush2.msra.mxu0 %v271
        %345 = vmatprep.subr.mxu0 0.0
        %346 = vmatpush2.msra.mxu0 %v270
        %347 = vmatprep.subr.mxu0 0.0
        %348 = vmatpush2.msra.mxu0 %v269
        %349 = vmatprep.subr.mxu0 0.0
        %350 = vmatpush2.msra.mxu0 %v268
        %351 = vmatprep.subr.mxu0 0.0
        %352 = vmatpush2.msra.mxu0 %v267
        %353 = vmatprep.subr.mxu0 0.0
        %354 = vmatpush2.msra.mxu0 %v266
        %355 = vmatprep.subr.mxu0 0.0
        %356 = vmatpush2.msra.mxu0 %v265
        %357 = vmatprep.subr.mxu0 0.0
        %358 = vmatpush2.msra.mxu0 %v264
        %359 = vmatprep.subr.mxu0 0.0
        %360 = vmatpush2.msra.mxu0 %v263
        %361 = vmatprep.subr.mxu0 0.0
        %362 = vmatpush2.msra.mxu0 %v262
        %363 = vmatprep.mubr.f32.mxu0 %v244
        %364 = vmatmul.mubr.f32.gmra.mxu0 %v243
        %v365 = vpop.f32.mrf.mxu0
        %v366 = vadd.f32 %v298, %v365
        %v367 = vpop.f32.mrf.mxu0
        %368 = vdwg.mxu0
        %369 = vmatprep.subr.mxu0 0.0
        %370 = vmatpush1.msra.mxu0 %v293
        %371 = vmatprep.subr.mxu0 0.0
        %372 = vmatpush1.msra.mxu0 %v292
        %373 = vmatprep.subr.mxu0 0.0
        %374 = vmatpush1.msra.mxu0 %v291
        %375 = vmatprep.subr.mxu0 0.0
        %376 = vmatpush1.msra.mxu0 %v290
        %377 = vmatprep.subr.mxu0 0.0
        %378 = vmatpush1.msra.mxu0 %v289
        %379 = vmatprep.subr.mxu0 0.0
        %380 = vmatpush1.msra.mxu0 %v288
        %381 = vmatprep.subr.mxu0 0.0
        %382 = vmatpush1.msra.mxu0 %v287
        %383 = vmatprep.subr.mxu0 0.0
        %384 = vmatpush1.msra.mxu0 %v286
        %385 = vmatprep.subr.mxu0 0.0
        %386 = vmatpush1.msra.mxu0 %v285
        %387 = vmatprep.subr.mxu0 0.0
        %388 = vmatpush1.msra.mxu0 %v284
        %389 = vmatprep.subr.mxu0 0.0
        %390 = vmatpush1.msra.mxu0 %v283
        %391 = vmatprep.subr.mxu0 0.0
        %392 = vmatpush1.msra.mxu0 %v282
        %393 = vmatprep.subr.mxu0 0.0
        %394 = vmatpush1.msra.mxu0 %v281
        %395 = vmatprep.subr.mxu0 0.0
        %396 = vmatpush1.msra.mxu0 %v280
        %397 = vmatprep.subr.mxu0 0.0
        %398 = vmatpush1.msra.mxu0 %v279
        %399 = vmatprep.subr.mxu0 0.0
        %400 = vmatpush1.msra.mxu0 %v278
        %401 = vmatprep.subr.mxu0 0.0
        %402 = vmatpush2.msra.mxu0 0.0
        %403 = vmatprep.subr.mxu0 0.0
        %404 = vmatpush2.msra.mxu0 0.0
        %405 = vmatprep.subr.mxu0 0.0
        %406 = vmatpush2.msra.mxu0 0.0
        %407 = vmatprep.subr.mxu0 0.0
        %408 = vmatpush2.msra.mxu0 0.0
        %409 = vmatprep.subr.mxu0 0.0
        %410 = vmatpush2.msra.mxu0 0.0
        %411 = vmatprep.subr.mxu0 0.0
        %412 = vmatpush2.msra.mxu0 0.0
        %413 = vmatprep.subr.mxu0 0.0
        %414 = vmatpush2.msra.mxu0 0.0
        %415 = vmatprep.subr.mxu0 0.0
        %416 = vmatpush2.msra.mxu0 0.0
        %417 = vmatprep.subr.mxu0 0.0
        %418 = vmatpush2.msra.mxu0 0.0
        %419 = vmatprep.subr.mxu0 0.0
        %420 = vmatpush2.msra.mxu0 0.0
        %421 = vmatprep.subr.mxu0 0.0
        %422 = vmatpush2.msra.mxu0 0.0
        %423 = vmatprep.subr.mxu0 0.0
        %424 = vmatpush2.msra.mxu0 0.0
        %425 = vmatprep.subr.mxu0 0.0
        %426 = vmatpush2.msra.mxu0 0.0
        %427 = vmatprep.subr.mxu0 0.0
        %428 = vmatpush2.msra.mxu0 0.0
        %429 = vmatprep.subr.mxu0 0.0
        %430 = vmatpush2.msra.mxu0 0.0
        %431 = vmatprep.subr.mxu0 0.0
        %432 = vmatpush2.msra.mxu0 0.0
        %433 = vmatprep.mubr.f32.mxu0 0.0
        %434 = vmatmul.mubr.f32.gmra.mxu0 %v245
        %v435 = vpop.f32.mrf.mxu0
        %v436 = vadd.f32 %v366, %v435
        %v437 = vpop.f32.mrf.mxu0
        %438 = vdwg.mxu0
        %vm439 = vcmp.gt.f32.partialorder %v436, 0.0
        %v440 = vmul.f32 %v436, 0.01
        %v441 = vsel %vm439, %v436, %v440
        %v442 = vld [vmem:[#allocation7] sm:$0xff]
        %v443 = vld [vmem:[#allocation7 + $0x8] sm:$0xff]
        %v444 = vld [vmem:[#allocation7 + $0x10] sm:$0xff]
        %v445 = vld [vmem:[#allocation7 + $0x18] sm:$0xff]
        %v446 = vld [vmem:[#allocation7 + $0x20] sm:$0xff]
        %v447 = vld [vmem:[#allocation7 + $0x28] sm:$0xff]
        %v448 = vld [vmem:[#allocation7 + $0x30] sm:$0xff]
        %v449 = vld [vmem:[#allocation7 + $0x38] sm:$0xff]
        %v450 = vld [vmem:[#allocation7 + $0x40] sm:$0xff]
        %v451 = vld [vmem:[#allocation7 + $0x48] sm:$0xff]
        %v452 = vld [vmem:[#allocation7 + $0x50] sm:$0xff]
        %v453 = vld [vmem:[#allocation7 + $0x58] sm:$0xff]
        %v454 = vld [vmem:[#allocation7 + $0x60] sm:$0xff]
        %v455 = vld [vmem:[#allocation7 + $0x68] sm:$0xff]
        %v456 = vld [vmem:[#allocation7 + $0x70] sm:$0xff]
        %v457 = vld [vmem:[#allocation7 + $0x78] sm:$0xff]
        %v458 = vld [vmem:[%s3 + $0x1] sm:$0x1]
        %v459 = vlaneseq
        %v460 = vshrl.u32 %v459, 7
        %v461 = vsub.s32 0, %v460
        %v462 = vrot.slane %v458, %v461
        %463 = vmatprep.subr.mxu0 0.0
        %464 = vmatpush1.msra.mxu0 %v457
        %465 = vmatprep.subr.mxu0 0.0
        %466 = vmatpush1.msra.mxu0 %v456
        %467 = vmatprep.subr.mxu0 0.0
        %468 = vmatpush1.msra.mxu0 %v455
        %469 = vmatprep.subr.mxu0 0.0
        %470 = vmatpush1.msra.mxu0 %v454
        %471 = vmatprep.subr.mxu0 0.0
        %472 = vmatpush1.msra.mxu0 %v453
        %473 = vmatprep.subr.mxu0 0.0
        %474 = vmatpush1.msra.mxu0 %v452
        %475 = vmatprep.subr.mxu0 0.0
        %476 = vmatpush1.msra.mxu0 %v451
        %477 = vmatprep.subr.mxu0 0.0
        %478 = vmatpush1.msra.mxu0 %v450
        %479 = vmatprep.subr.mxu0 0.0
        %480 = vmatpush1.msra.mxu0 %v449
        %481 = vmatprep.subr.mxu0 0.0
        %482 = vmatpush1.msra.mxu0 %v448
        %483 = vmatprep.subr.mxu0 0.0
        %484 = vmatpush1.msra.mxu0 %v447
        %485 = vmatprep.subr.mxu0 0.0
        %486 = vmatpush1.msra.mxu0 %v446
        %487 = vmatprep.subr.mxu0 0.0
        %488 = vmatpush1.msra.mxu0 %v445
        %489 = vmatprep.subr.mxu0 0.0
        %490 = vmatpush1.msra.mxu0 %v444
        %491 = vmatprep.subr.mxu0 0.0
        %492 = vmatpush1.msra.mxu0 %v443
        %493 = vmatprep.subr.mxu0 0.0
        %494 = vmatpush1.msra.mxu0 %v442
        %495 = vmatprep.subr.mxu0 0.0
        %496 = vmatpush2.msra.mxu0 0.0
        %497 = vmatprep.subr.mxu0 0.0
        %498 = vmatpush2.msra.mxu0 0.0
        %499 = vmatprep.subr.mxu0 0.0
        %500 = vmatpush2.msra.mxu0 0.0
        %501 = vmatprep.subr.mxu0 0.0
        %502 = vmatpush2.msra.mxu0 0.0
        %503 = vmatprep.subr.mxu0 0.0
        %504 = vmatpush2.msra.mxu0 0.0
        %505 = vmatprep.subr.mxu0 0.0
        %506 = vmatpush2.msra.mxu0 0.0
        %507 = vmatprep.subr.mxu0 0.0
        %508 = vmatpush2.msra.mxu0 0.0
        %509 = vmatprep.subr.mxu0 0.0
        %510 = vmatpush2.msra.mxu0 0.0
        %511 = vmatprep.subr.mxu0 0.0
        %512 = vmatpush2.msra.mxu0 0.0
        %513 = vmatprep.subr.mxu0 0.0
        %514 = vmatpush2.msra.mxu0 0.0
        %515 = vmatprep.subr.mxu0 0.0
        %516 = vmatpush2.msra.mxu0 0.0
        %517 = vmatprep.subr.mxu0 0.0
        %518 = vmatpush2.msra.mxu0 0.0
        %519 = vmatprep.subr.mxu0 0.0
        %520 = vmatpush2.msra.mxu0 0.0
        %521 = vmatprep.subr.mxu0 0.0
        %522 = vmatpush2.msra.mxu0 0.0
        %523 = vmatprep.subr.mxu0 0.0
        %524 = vmatpush2.msra.mxu0 0.0
        %525 = vmatprep.subr.mxu0 0.0
        %526 = vmatpush2.msra.mxu0 0.0
        %527 = vmatprep.mubr.f32.mxu0 0.0
        %528 = vmatmul.mubr.f32.gmra.mxu0 %v441
        %v529 = vpop.f32.mrf.mxu0
        %v530 = vadd.f32 %v462, %v529
        %v531 = vpop.f32.mrf.mxu0
        %532 = vdwg.mxu0
        %vm533 = vcmp.gt.f32.partialorder %v530, 0.0
        %v534 = vmul.f32 %v530, 0.01
        %v535 = vsel %vm533, %v530, %v534
        %536 = vst [vmem:[%s242] sm:$0xff] %v535
        %s537 = sand.u32 %s119, 1
        %s538 = scalar_lea.sflag [#allocation4], %s537
        %s539 = sand.u32 %s119, 1
        %s540 = smul.addr %s539, 8
        %s541 = scalar_lea.vmem [#allocation8], %s540
        // Predicated region
        $region49: #{tpu_custom_call.1} parent=35 // pred_check
          %p542 = pneg %p129
        $region50: #{tpu_custom_call.1} parent=35 // pred_check_branch
          %544 = sbr.rel (%p542) target = $region52
        $region51: #{tpu_custom_call.1} parent=35 // pred_region
          %s546 = ssub.s32 128, 128
          %547 = vsyncadd %s538, %s546
          %s548 = smul.addr %s22, 128
          %s549 = scalar_lea.hbm %s4, %s548
          %s551 = sshll.u32 %s541, 4
          %s552 = int_to_ptr.vmem [resolvable:$true] %s551
          %554 = dma.vmem_to_hbm [thread:$0]  %s552, 128, %s549, %s538
        $region52: #{tpu_custom_call.1} parent=35 // pred_fallthru
          _
      $region36: #{tpu_custom_call.1} parent=5 // pred_fallthru
        _
      %p555 = scmp.le.s32.totalorder 2, %s17
      // Predicated region
      $region53: #{tpu_custom_call.1} parent=5 // pred_check
        %p556 = pneg %p555
      $region54: #{tpu_custom_call.1} parent=5 // pred_check_branch
        %558 = sbr.rel (%p556) target = $region56
      $region55: #{tpu_custom_call.1} parent=5 // pred_region
        %s559 = ssub.s32 %s17, 2
        // Predicated region
        $region57: #{tpu_custom_call.1} parent=55 // pred_check
          %p560 = pneg %p135
        $region58: #{tpu_custom_call.1} parent=55 // pred_check_branch
          %562 = sbr.rel (%p560) target = $region60
        $region59: #{tpu_custom_call.1} parent=55 // pred_region
          %s563 = sand.u32 %s120, 1
          %s564 = scalar_lea.sflag [#allocation4], %s563
          %s565 = sand.u32 %s120, 1
          %s566 = smul.addr %s565, 8
          %s567 = scalar_lea.vmem [#allocation8], %s566
          %568 = dma.done %s564, 128
        $region60: #{tpu_custom_call.1} parent=55 // pred_fallthru
          _
      $region56: #{tpu_custom_call.1} parent=5 // pred_fallthru
        _
    $region6: #{tpu_custom_call.1} parent=1 // loop_footer
      %s21 = sadd.s32 1, %s17
    $region7: #{tpu_custom_call.1} parent=1 // loop_footer_branch
      %16 = sbr.rel target = $region3
    $region8: #{tpu_custom_call.1} parent=1 // loop_exit
      _
    %569 = vsyncpa [#allocation3], 1
    %s570 = scalar_lea.sflag [#allocation3], 1
    %571 = vsyncpa %s570, 1
    %572 = vsyncpa [#allocation6], 1
    %573 = vsyncpa [#allocation4], 1
    %s574 = scalar_lea.sflag [#allocation4], 1
    %575 = vsyncpa %s574, 1

</llo_original>
